<compile_context>
chip_gen: v7x
topology: tpu7x:2x2x1
jax: 0.10.0
libtpu: 0.0.40
codegen_flags: <defaults>
</compile_context>

<pallas_src>
import jax
import jax.numpy as jnp
from jax import lax
from jax.experimental import pallas as pl
from jax.experimental.pallas import tpu as pltpu


def _round_up(n, m):
    return ((n + m - 1) // m) * m


def _choose_tile_b(batch, tile_b):
    """Pick a lane-aligned batch tile (multiple of 128), preferring >=2 grid steps."""
    tile_b = _round_up(max(128, tile_b), 128)
    # Never bigger than the (128-rounded) batch.
    tile_b = min(tile_b, _round_up(batch, 128))
    # Prefer at least two grid steps so the "parallel" batch axis can be
    # sharded across both TensorCores on v7x.
    if batch > 128:
        tile_b = min(tile_b, _round_up(pl.cdiv(batch, 2), 128))
    return max(128, tile_b)


def snake_mlp_kernel(x_ref, w1_ref, b1_ref, w2_ref, b2_ref,
                     w3_ref, b3_ref, w4_ref, b4_ref, o_ref):
    # x block: (tile_b, 26) in its original f32 dtype; cast to bf16 in-kernel
    # (VPU work, hidden under the MXU pushes of the layer chain).
    xb = x_ref[...].astype(jnp.bfloat16)

    # Layer 1 (batch-on-lanes): h1T[o, b] = sum_i w1[o, i] * x[b, i]
    # (contracting the trailing "in" axis of both operands == trans_b matmul,
    #  so no wrapper transpose of x is needed).
    h = lax.dot_general(w1_ref[...], xb, (((1,), (1,)), ((), ())),
                        preferred_element_type=jnp.float32)
    h = jnp.maximum(h + b1_ref[...], 0.0).astype(jnp.bfloat16)

    # Layers 2-4: weights in PyTorch-native (out, in) layout, activations
    # stay (features, tile_b) so the batch remains on the lane axis.
    h = jnp.dot(w2_ref[...], h, preferred_element_type=jnp.float32)
    h = jnp.maximum(h + b2_ref[...], 0.0).astype(jnp.bfloat16)

    h = jnp.dot(w3_ref[...], h, preferred_element_type=jnp.float32)
    h = jnp.maximum(h + b3_ref[...], 0.0).astype(jnp.bfloat16)

    h = jnp.dot(w4_ref[...], h, preferred_element_type=jnp.float32)
    # (4, tile_b) block: lane-dense f32 store and dense writeback DMA.
    o_ref[...] = (h + b4_ref[...]).astype(o_ref.dtype)


def snake_nn_forward(x, params, tile_b=4096):
    """x: (B, 26) float32. params: bf16 weights in (out, in), f32 biases (out, 1)."""
    B = x.shape[0]
    tile_b = _choose_tile_b(B, tile_b)
    pb = _round_up(B, tile_b)
    if pb != B:
        # Only a partial-tile pad of f32 rows (no wrapper dtype cast any more).
        x = jnp.pad(x, ((0, pb - B), (0, 0)))

    w1, b1, w2, b2, w3, b3, w4, b4 = (
        params["w1"], params["b1"], params["w2"], params["b2"],
        params["w3"], params["b3"], params["w4"], params["b4"],
    )

    # Weights/biases: full-array blocks with constant index_map -> DMA'd once,
    # VMEM-resident across all grid steps.
    const2d = lambda arr: pl.BlockSpec(arr.shape, lambda i: (0, 0))

    out_t = pl.pallas_call(
        snake_mlp_kernel,
        out_shape=jax.ShapeDtypeStruct((4, pb), jnp.float32),
        grid=(pb // tile_b,),
        in_specs=[
            pl.BlockSpec((tile_b, 26), lambda i: (i, 0)),   # x: batch-tiled, f32
            const2d(w1), const2d(b1),
            const2d(w2), const2d(b2),
            const2d(w3), const2d(b3),
            const2d(w4), const2d(b4),
        ],
        out_specs=pl.BlockSpec((4, tile_b), lambda i: (0, i)),  # lane-dense output
        compiler_params=pltpu.CompilerParams(
            dimension_semantics=("parallel",),   # megacore sharding on v7x
            vmem_limit_bytes=48 << 20,           # headroom on v6e, < v7x 64 MiB
        ),
    )(x, w1, b1, w2, b2, w3, b3, w4, b4)

    # (4, pb) -> (B, 4); tiny transpose over 4*B elements.
    return out_t[:, :B].T


def init_params(key):
    """Deterministic init matching the PyTorch layer shapes.

    nn.Linear(in, out) has weight (out, in), bias (out,).  Weights are kept in
    the native (out, in) layout as bf16 (MXU dtype); biases as (out, 1) f32 so
    they broadcast over the lane (batch) axis in the transposed formulation.
    Note: bf16 weights / bf16 inter-layer activations differ from an f32
    PyTorch SnakeNN by ~1e-2 relative error (intentional MXU-friendly recipe).
    """
    dims = [(26, 64), (64, 128), (128, 64), (64, 4)]
    params = {}
    keys = jax.random.split(key, 2 * len(dims))
    for i, (fan_in, fan_out) in enumerate(dims):
        bound = 1.0 / jnp.sqrt(float(fan_in))  # PyTorch default Linear init range
        w = jax.random.uniform(keys[2 * i], (fan_out, fan_in),
                               minval=-bound, maxval=bound, dtype=jnp.float32)
        b = jax.random.uniform(keys[2 * i + 1], (fan_out, 1),
                               minval=-bound, maxval=bound, dtype=jnp.float32)
        params[f"w{i + 1}"] = w.astype(jnp.bfloat16)
        params[f"b{i + 1}"] = b
    return params


def reference_forward(x, params):
    """Pure-JAX reference with the same bf16-in / f32-accumulate recipe."""
    xb = x.astype(jnp.bfloat16)
    h = lax.dot_general(params["w1"], xb, (((1,), (1,)), ((), ())),
                        preferred_element_type=jnp.float32)
    h = jnp.maximum(h + params["b1"], 0.0).astype(jnp.bfloat16)
    h = jnp.dot(params["w2"], h, preferred_element_type=jnp.float32)
    h = jnp.maximum(h + params["b2"], 0.0).astype(jnp.bfloat16)
    h = jnp.dot(params["w3"], h, preferred_element_type=jnp.float32)
    h = jnp.maximum(h + params["b3"], 0.0).astype(jnp.bfloat16)
    h = jnp.dot(params["w4"], h, preferred_element_type=jnp.float32)
    return (h + params["b4"]).T


if __name__ == "__main__":
    key = jax.random.PRNGKey(0)
    pkey, xkey = jax.random.split(key)
    params = init_params(pkey)

    B = 2
    x = jax.random.normal(xkey, (B, 26), dtype=jnp.float32)

    out = snake_nn_forward(x, params)
    out = jax.block_until_ready(out)

    ref = reference_forward(x, params)
    assert out.shape == (B, 4), out.shape
    assert jnp.allclose(out, ref, atol=2e-2, rtol=2e-2), "mismatch vs pure-JAX reference"

    print("KERNEL_OK")
</pallas_src>

<mosaic_0001>
module attributes {stable_mosaic.version = 11 : i64} {
  func.func @snake_mlp_kernel(%arg0: i32, %arg1: memref<128x26xf32, #tpu.memory_space<vmem>>, %arg2: memref<64x26xbf16, #tpu.memory_space<vmem>>, %arg3: memref<64x1xf32, #tpu.memory_space<vmem>>, %arg4: memref<128x64xbf16, #tpu.memory_space<vmem>>, %arg5: memref<128x1xf32, #tpu.memory_space<vmem>>, %arg6: memref<64x128xbf16, #tpu.memory_space<vmem>>, %arg7: memref<64x1xf32, #tpu.memory_space<vmem>>, %arg8: memref<4x64xbf16, #tpu.memory_space<vmem>>, %arg9: memref<4x1xf32, #tpu.memory_space<vmem>>, %arg10: memref<4x128xf32, #tpu.memory_space<vmem>>) attributes {dimension_semantics = [#tpu.dimension_semantics<parallel>], iteration_bounds = array<i64: 1>, scalar_prefetch = 0 : i64, scratch_operands = 0 : i64, tpu.core_type = #tpu.core_type<tc>, window_params = [{transform_indices = @transform_0, window_bounds = array<i64: 128, 26>}, {pipeline_mode = #tpu.pipeline_mode<synchronous>, transform_indices = @transform_1, window_bounds = array<i64: 64, 26>}, {pipeline_mode = #tpu.pipeline_mode<synchronous>, transform_indices = @transform_2, window_bounds = array<i64: 64, 1>}, {pipeline_mode = #tpu.pipeline_mode<synchronous>, transform_indices = @transform_3, window_bounds = array<i64: 128, 64>}, {pipeline_mode = #tpu.pipeline_mode<synchronous>, transform_indices = @transform_4, window_bounds = array<i64: 128, 1>}, {pipeline_mode = #tpu.pipeline_mode<synchronous>, transform_indices = @transform_5, window_bounds = array<i64: 64, 128>}, {pipeline_mode = #tpu.pipeline_mode<synchronous>, transform_indices = @transform_6, window_bounds = array<i64: 64, 1>}, {pipeline_mode = #tpu.pipeline_mode<synchronous>, transform_indices = @transform_7, window_bounds = array<i64: 4, 64>}, {pipeline_mode = #tpu.pipeline_mode<synchronous>, transform_indices = @transform_8, window_bounds = array<i64: 4, 1>}, {transform_indices = @transform_9, window_bounds = array<i64: 4, 128>}]} {
    %c0 = arith.constant 0 : index
    %c0_0 = arith.constant 0 : index
    %0 = vector.load %arg1[%c0, %c0_0] : memref<128x26xf32, #tpu.memory_space<vmem>>, vector<128x26xf32>
    %1 = arith.truncf %0 : vector<128x26xf32> to vector<128x26xbf16>
    %c0_1 = arith.constant 0 : index
    %c0_2 = arith.constant 0 : index
    %2 = vector.load %arg2[%c0_1, %c0_2] : memref<64x26xbf16, #tpu.memory_space<vmem>>, vector<64x26xbf16>
    %cst = arith.constant dense<0.000000e+00> : vector<64x128xf32>
    %3 = tpu.matmul %2, %1, %cst {dimension_numbers = #tpu.dot_dimension_numbers<[1], [1], [0], [0], [0, 0, 1, 0], [], []>} : vector<64x26xbf16>, vector<128x26xbf16>, vector<64x128xf32> -> vector<64x128xf32>
    %c0_3 = arith.constant 0 : index
    %c0_4 = arith.constant 0 : index
    %4 = vector.load %arg3[%c0_3, %c0_4] : memref<64x1xf32, #tpu.memory_space<vmem>>, vector<64x1xf32>
    %5 = vector.broadcast %4 : vector<64x1xf32> to vector<64x128xf32>
    %6 = arith.addf %3, %5 : vector<64x128xf32>
    %cst_5 = arith.constant 0.000000e+00 : f32
    %7 = vector.broadcast %cst_5 : f32 to vector<64x128xf32>
    %8 = arith.maximumf %6, %7 : vector<64x128xf32>
    %9 = arith.truncf %8 : vector<64x128xf32> to vector<64x128xbf16>
    %c0_6 = arith.constant 0 : index
    %c0_7 = arith.constant 0 : index
    %10 = vector.load %arg4[%c0_6, %c0_7] : memref<128x64xbf16, #tpu.memory_space<vmem>>, vector<128x64xbf16>
    %cst_8 = arith.constant dense<0.000000e+00> : vector<128x128xf32>
    %11 = tpu.matmul %10, %9, %cst_8 {dimension_numbers = #tpu.dot_dimension_numbers<[1], [0], [0], [1], [0, 0, 1, 1], [], []>} : vector<128x64xbf16>, vector<64x128xbf16>, vector<128x128xf32> -> vector<128x128xf32>
    %c0_9 = arith.constant 0 : index
    %c0_10 = arith.constant 0 : index
    %12 = vector.load %arg5[%c0_9, %c0_10] : memref<128x1xf32, #tpu.memory_space<vmem>>, vector<128x1xf32>
    %13 = vector.broadcast %12 : vector<128x1xf32> to vector<128x128xf32>
    %14 = arith.addf %11, %13 : vector<128x128xf32>
    %cst_11 = arith.constant 0.000000e+00 : f32
    %15 = vector.broadcast %cst_11 : f32 to vector<128x128xf32>
    %16 = arith.maximumf %14, %15 : vector<128x128xf32>
    %17 = arith.truncf %16 : vector<128x128xf32> to vector<128x128xbf16>
    %c0_12 = arith.constant 0 : index
    %c0_13 = arith.constant 0 : index
    %18 = vector.load %arg6[%c0_12, %c0_13] : memref<64x128xbf16, #tpu.memory_space<vmem>>, vector<64x128xbf16>
    %cst_14 = arith.constant dense<0.000000e+00> : vector<64x128xf32>
    %19 = tpu.matmul %18, %17, %cst_14 {dimension_numbers = #tpu.dot_dimension_numbers<[1], [0], [0], [1], [0, 0, 1, 1], [], []>} : vector<64x128xbf16>, vector<128x128xbf16>, vector<64x128xf32> -> vector<64x128xf32>
    %c0_15 = arith.constant 0 : index
    %c0_16 = arith.constant 0 : index
    %20 = vector.load %arg7[%c0_15, %c0_16] : memref<64x1xf32, #tpu.memory_space<vmem>>, vector<64x1xf32>
    %21 = vector.broadcast %20 : vector<64x1xf32> to vector<64x128xf32>
    %22 = arith.addf %19, %21 : vector<64x128xf32>
    %cst_17 = arith.constant 0.000000e+00 : f32
    %23 = vector.broadcast %cst_17 : f32 to vector<64x128xf32>
    %24 = arith.maximumf %22, %23 : vector<64x128xf32>
    %25 = arith.truncf %24 : vector<64x128xf32> to vector<64x128xbf16>
    %c0_18 = arith.constant 0 : index
    %c0_19 = arith.constant 0 : index
    %26 = vector.load %arg8[%c0_18, %c0_19] : memref<4x64xbf16, #tpu.memory_space<vmem>>, vector<4x64xbf16>
    %cst_20 = arith.constant dense<0.000000e+00> : vector<4x128xf32>
    %27 = tpu.matmul %26, %25, %cst_20 {dimension_numbers = #tpu.dot_dimension_numbers<[1], [0], [0], [1], [0, 0, 1, 1], [], []>} : vector<4x64xbf16>, vector<64x128xbf16>, vector<4x128xf32> -> vector<4x128xf32>
    %c0_21 = arith.constant 0 : index
    %c0_22 = arith.constant 0 : index
    %28 = vector.load %arg9[%c0_21, %c0_22] : memref<4x1xf32, #tpu.memory_space<vmem>>, vector<4x1xf32>
    %29 = vector.broadcast %28 : vector<4x1xf32> to vector<4x128xf32>
    %30 = arith.addf %27, %29 : vector<4x128xf32>
    %c0_23 = arith.constant 0 : index
    %c0_24 = arith.constant 0 : index
    %31 = vector.load %arg10[%c0_23, %c0_24] : memref<4x128xf32, #tpu.memory_space<vmem>>, vector<4x128xf32>
    tpu.vector_store %arg10[%c0_23, %c0_24], %30 {strides = array<i32>} : memref<4x128xf32, #tpu.memory_space<vmem>>, vector<4x128xf32>,
    return
  }
  func.func @transform_0(%arg0: i32) -> (i32, i32) {
    %c0_i32 = arith.constant 0 : i32
    %c0_i32_0 = arith.constant 0 : i32
    return %arg0, %c0_i32 : i32, i32
  }
  func.func @transform_1(%arg0: i32) -> (i32, i32) {
    %c0_i32 = arith.constant 0 : i32
    %c0_i32_0 = arith.constant 0 : i32
    %c0_i32_1 = arith.constant 0 : i32
    return %c0_i32, %c0_i32_0 : i32, i32
  }
  func.func @transform_2(%arg0: i32) -> (i32, i32) {
    %c0_i32 = arith.constant 0 : i32
    %c0_i32_0 = arith.constant 0 : i32
    %c0_i32_1 = arith.constant 0 : i32
    return %c0_i32, %c0_i32_0 : i32, i32
  }
  func.func @transform_3(%arg0: i32) -> (i32, i32) {
    %c0_i32 = arith.constant 0 : i32
    %c0_i32_0 = arith.constant 0 : i32
    %c0_i32_1 = arith.constant 0 : i32
    return %c0_i32, %c0_i32_0 : i32, i32
  }
  func.func @transform_4(%arg0: i32) -> (i32, i32) {
    %c0_i32 = arith.constant 0 : i32
    %c0_i32_0 = arith.constant 0 : i32
    %c0_i32_1 = arith.constant 0 : i32
    return %c0_i32, %c0_i32_0 : i32, i32
  }
  func.func @transform_5(%arg0: i32) -> (i32, i32) {
    %c0_i32 = arith.constant 0 : i32
    %c0_i32_0 = arith.constant 0 : i32
    %c0_i32_1 = arith.constant 0 : i32
    return %c0_i32, %c0_i32_0 : i32, i32
  }
  func.func @transform_6(%arg0: i32) -> (i32, i32) {
    %c0_i32 = arith.constant 0 : i32
    %c0_i32_0 = arith.constant 0 : i32
    %c0_i32_1 = arith.constant 0 : i32
    return %c0_i32, %c0_i32_0 : i32, i32
  }
  func.func @transform_7(%arg0: i32) -> (i32, i32) {
    %c0_i32 = arith.constant 0 : i32
    %c0_i32_0 = arith.constant 0 : i32
    %c0_i32_1 = arith.constant 0 : i32
    return %c0_i32, %c0_i32_0 : i32, i32
  }
  func.func @transform_8(%arg0: i32) -> (i32, i32) {
    %c0_i32 = arith.constant 0 : i32
    %c0_i32_0 = arith.constant 0 : i32
    %c0_i32_1 = arith.constant 0 : i32
    return %c0_i32, %c0_i32_0 : i32, i32
  }
  func.func @transform_9(%arg0: i32) -> (i32, i32) {
    %c0_i32 = arith.constant 0 : i32
    %c0_i32_0 = arith.constant 0 : i32
    return %c0_i32, %arg0 : i32, i32
  }
}

</mosaic_0001>

<llo_original>
// kernel: tpu_custom_call.1
$region0: #{tpu_custom_call.1}
  #allocation0 [shape = 'u32[]', space=smem, size = 0x4, offset = 0x4, fixed_abs, tag = 'smem constant byte address 0x4 - core index']
  #allocation1 [shape = 'u32[144,128]{1,0:T(1,128)}', space=vmem, size = 0x12000, scoped, tag = 'internal scratch']
  %s0 = inlined_call_operand.vmem [shape: f32[128,26], index: 0, kind: input, shape index: {}]
  %s1 = inlined_call_operand.vmem [shape: bf16[64,26], index: 1, kind: input, shape index: {}]
  %s2 = inlined_call_operand.vmem [shape: f32[64,1], index: 2, kind: input, shape index: {}]
  %s3 = inlined_call_operand.vmem [shape: bf16[128,64], index: 3, kind: input, shape index: {}]
  %s4 = inlined_call_operand.vmem [shape: f32[128,1], index: 4, kind: input, shape index: {}]
  %s5 = inlined_call_operand.vmem [shape: bf16[64,128], index: 5, kind: input, shape index: {}]
  %s6 = inlined_call_operand.vmem [shape: f32[64,1], index: 6, kind: input, shape index: {}]
  %s7 = inlined_call_operand.vmem [shape: bf16[4,64], index: 7, kind: input, shape index: {}]
  %s8 = inlined_call_operand.vmem [shape: f32[4,1], index: 8, kind: input, shape index: {}]
  %s9 = inlined_call_operand.hbm [shape: f32[4,128], index: 9, kind: output, shape index: {}]
  %s10 = sld [smem:[#allocation0]]
  $region46: #{tpu_custom_call.1} parent=0
    _
  %s12 = ssub.s32 1, %s10
  %s13 = scalar_select 0, %s12, %s10
  $region1: #{tpu_custom_call.1} parent=0
    #allocation2 [shape = 'u8[2048]{0}', space=vmem, size = 0x800, scoped, tag = 'output window, operand 0, single buffered']
    #allocation3 [shape = 's32[1]{0}', space=sflag, size = 0x4, scoped, tag = 'scoped memory for tpu_custom_call.1']
    %14 = vsyncpa [#allocation3], 0
    // Predicated region
    $region2: #{tpu_custom_call.1} parent=1 // pred_check
      _
    $region3: #{tpu_custom_call.1} parent=1 // pred_check_branch
      %16 = sbr.rel (0) target = $region5
    $region4: #{tpu_custom_call.1} parent=1 // pred_region
      _
    $region5: #{tpu_custom_call.1} parent=1 // pred_fallthru
      _
    // Predicated region
    $region6: #{tpu_custom_call.1} parent=1 // pred_check
      _
    $region7: #{tpu_custom_call.1} parent=1 // pred_check_branch
      %18 = sbr.rel (0) target = $region9
    $region8: #{tpu_custom_call.1} parent=1 // pred_region
      _
    $region9: #{tpu_custom_call.1} parent=1 // pred_fallthru
      _
    // Predicated region
    $region10: #{tpu_custom_call.1} parent=1 // pred_check
      _
    $region11: #{tpu_custom_call.1} parent=1 // pred_check_branch
      %20 = sbr.rel (0) target = $region13
    $region12: #{tpu_custom_call.1} parent=1 // pred_region
      _
    $region13: #{tpu_custom_call.1} parent=1 // pred_fallthru
      _
    // Predicated region
    $region14: #{tpu_custom_call.1} parent=1 // pred_check
      _
    $region15: #{tpu_custom_call.1} parent=1 // pred_check_branch
      %22 = sbr.rel (0) target = $region17
    $region16: #{tpu_custom_call.1} parent=1 // pred_region
      _
    $region17: #{tpu_custom_call.1} parent=1 // pred_fallthru
      _
    // Predicated region
    $region18: #{tpu_custom_call.1} parent=1 // pred_check
      _
    $region19: #{tpu_custom_call.1} parent=1 // pred_check_branch
      %24 = sbr.rel (0) target = $region21
    $region20: #{tpu_custom_call.1} parent=1 // pred_region
      _
    $region21: #{tpu_custom_call.1} parent=1 // pred_fallthru
      _
    // Predicated region
    $region22: #{tpu_custom_call.1} parent=1 // pred_check
      _
    $region23: #{tpu_custom_call.1} parent=1 // pred_check_branch
      %26 = sbr.rel (0) target = $region25
    $region24: #{tpu_custom_call.1} parent=1 // pred_region
      _
    $region25: #{tpu_custom_call.1} parent=1 // pred_fallthru
      _
    // Predicated region
    $region26: #{tpu_custom_call.1} parent=1 // pred_check
      _
    $region27: #{tpu_custom_call.1} parent=1 // pred_check_branch
      %28 = sbr.rel (0) target = $region29
    $region28: #{tpu_custom_call.1} parent=1 // pred_region
      _
    $region29: #{tpu_custom_call.1} parent=1 // pred_fallthru
      _
    // Predicated region
    $region30: #{tpu_custom_call.1} parent=1 // pred_check
      _
    $region31: #{tpu_custom_call.1} parent=1 // pred_check_branch
      %30 = sbr.rel (0) target = $region33
    $region32: #{tpu_custom_call.1} parent=1 // pred_region
      _
    $region33: #{tpu_custom_call.1} parent=1 // pred_fallthru
      _
    // Predicated region
    $region34: #{tpu_custom_call.1} parent=1 // pred_check
      _
    $region35: #{tpu_custom_call.1} parent=1 // pred_check_branch
      %32 = sbr.rel (0) target = $region37
    $region36: #{tpu_custom_call.1} parent=1 // pred_region
      _
    $region37: #{tpu_custom_call.1} parent=1 // pred_fallthru
      _
    %v34 = vld [vmem:[%s0] sm:$0xff]
    %v35 = vld [vmem:[%s0 + $0x8] sm:$0xff]
    %v36 = vld [vmem:[%s0 + $0x10] sm:$0xff]
    %v37 = vld [vmem:[%s0 + $0x18] sm:$0xff]
    %v38 = vld [vmem:[%s0 + $0x20] sm:$0xff]
    %v39 = vld [vmem:[%s0 + $0x28] sm:$0xff]
    %v40 = vld [vmem:[%s0 + $0x30] sm:$0xff]
    %v41 = vld [vmem:[%s0 + $0x38] sm:$0xff]
    %v42 = vld [vmem:[%s0 + $0x40] sm:$0xff]
    %v43 = vld [vmem:[%s0 + $0x48] sm:$0xff]
    %v44 = vld [vmem:[%s0 + $0x50] sm:$0xff]
    %v45 = vld [vmem:[%s0 + $0x58] sm:$0xff]
    %v46 = vld [vmem:[%s0 + $0x60] sm:$0xff]
    %v47 = vld [vmem:[%s0 + $0x68] sm:$0xff]
    %v48 = vld [vmem:[%s0 + $0x70] sm:$0xff]
    %v49 = vld [vmem:[%s0 + $0x78] sm:$0xff]
    %v50 = vpack.c.bf16 %v35, %v34
    %v51 = vpack.c.bf16 %v37, %v36
    %v52 = vpack.c.bf16 %v39, %v38
    %v53 = vpack.c.bf16 %v41, %v40
    %v54 = vpack.c.bf16 %v43, %v42
    %v55 = vpack.c.bf16 %v45, %v44
    %v56 = vpack.c.bf16 %v47, %v46
    %v57 = vpack.c.bf16 %v49, %v48
    %v58 = vld [vmem:[%s1] sm:$0xf]
    %v59 = vld [vmem:[%s1 + $0x4] sm:$0xf]
    %v60 = vld [vmem:[%s1 + $0x8] sm:$0xf]
    %v61 = vld [vmem:[%s1 + $0xc] sm:$0xf]
    %v62 = vld [vmem:[%s1 + $0x10] sm:$0xf]
    %v63 = vld [vmem:[%s1 + $0x14] sm:$0xf]
    %v64 = vld [vmem:[%s1 + $0x18] sm:$0xf]
    %v65 = vld [vmem:[%s1 + $0x1c] sm:$0xf]
    %v66 = vld [vmem:[%s2] sm:$0xff]
    %v67 = vld [vmem:[%s2 + $0x8] sm:$0xff]
    %v68 = vld [vmem:[%s2 + $0x10] sm:$0xff]
    %v69 = vld [vmem:[%s2 + $0x18] sm:$0xff]
    %v70 = vld [vmem:[%s2 + $0x20] sm:$0xff]
    %v71 = vld [vmem:[%s2 + $0x28] sm:$0xff]
    %v72 = vld [vmem:[%s2 + $0x30] sm:$0xff]
    %v73 = vld [vmem:[%s2 + $0x38] sm:$0xff]
    %75 = vset.pattern.permute.xlu0 0
    %76 = vperm.xlu0 %75, %v66
    %v77 = vpop.permute.xlu0 %76
    %80 = vset.pattern.permute.xlu0 0
    %81 = vperm.xlu0 %80, %v67
    %v82 = vpop.permute.xlu0 %81
    %85 = vset.pattern.permute.xlu0 0
    %86 = vperm.xlu0 %85, %v68
    %v87 = vpop.permute.xlu0 %86
    %90 = vset.pattern.permute.xlu0 0
    %91 = vperm.xlu0 %90, %v69
    %v92 = vpop.permute.xlu0 %91
    %95 = vset.pattern.permute.xlu0 0
    %96 = vperm.xlu0 %95, %v70
    %v97 = vpop.permute.xlu0 %96
    %100 = vset.pattern.permute.xlu0 0
    %101 = vperm.xlu0 %100, %v71
    %v102 = vpop.permute.xlu0 %101
    %105 = vset.pattern.permute.xlu0 0
    %106 = vperm.xlu0 %105, %v72
    %v107 = vpop.permute.xlu0 %106
    %110 = vset.pattern.permute.xlu0 0
    %111 = vperm.xlu0 %110, %v73
    %v112 = vpop.permute.xlu0 %111
    %v122 = vunpack.c.l.b16 %v58
    %v123 = vunpack.c.l.b16 %v59
    %v124 = vunpack.c.l.b16 %v60
    %v125 = vunpack.c.l.b16 %v61
    %v126 = vunpack.c.l.b16 %v62
    %v127 = vunpack.c.l.b16 %v63
    %v128 = vunpack.c.l.b16 %v64
    %v129 = vunpack.c.l.b16 %v65
    %v130 = vpack.c.b16 %v123, %v122
    %v131 = vpack.c.b16 %v125, %v124
    %v132 = vpack.c.b16 %v127, %v126
    %v133 = vpack.c.b16 %v129, %v128
    %vm134 = vcmask 211968
    %v136 = vsel %vm134, %v130, 0
    %v139 = vsel %vm134, %v131, 0
    %v142 = vsel %vm134, %v132, 0
    %v145 = vsel %vm134, %v133, 0
    %v148 = vsel %vm134, %v50, 0
    %v151 = vsel %vm134, %v51, 0
    %v154 = vsel %vm134, %v52, 0
    %v157 = vsel %vm134, %v53, 0
    %v160 = vsel %vm134, %v54, 0
    %v163 = vsel %vm134, %v55, 0
    %v166 = vsel %vm134, %v56, 0
    %v169 = vsel %vm134, %v57, 0
    %171 = vmatprep.subr.bf16.mxu0 0
    %172 = vmatpush1.bf16.xpose.msra.mxu0 %v148
    %173 = vmatprep.subr.bf16.mxu0 0
    %174 = vmatpush1.bf16.xpose.msra.mxu0 %v151
    %175 = vmatprep.subr.bf16.mxu0 0
    %176 = vmatpush1.bf16.xpose.msra.mxu0 %v154
    %177 = vmatprep.subr.bf16.mxu0 0
    %178 = vmatpush1.bf16.xpose.msra.mxu0 %v157
    %179 = vmatprep.subr.bf16.mxu0 0
    %180 = vmatpush1.bf16.xpose.msra.mxu0 %v160
    %181 = vmatprep.subr.bf16.mxu0 0
    %182 = vmatpush1.bf16.xpose.msra.mxu0 %v163
    %183 = vmatprep.subr.bf16.mxu0 0
    %184 = vmatpush1.bf16.xpose.msra.mxu0 %v166
    %185 = vmatprep.subr.bf16.mxu0 0
    %186 = vmatpush1.bf16.xpose.msra.mxu0 %v169
    %187 = vmatprep.subr.bf16.mxu0 0
    %188 = vmatpush1.bf16.xpose.msra.mxu0 0
    %189 = vmatprep.subr.bf16.mxu0 0
    %190 = vmatpush1.bf16.xpose.msra.mxu0 0
    %191 = vmatprep.subr.bf16.mxu0 0
    %192 = vmatpush1.bf16.xpose.msra.mxu0 0
    %193 = vmatprep.subr.bf16.mxu0 0
    %194 = vmatpush1.bf16.xpose.msra.mxu0 0
    %195 = vmatprep.subr.bf16.mxu0 0
    %196 = vmatpush1.bf16.xpose.msra.mxu0 0
    %197 = vmatprep.subr.bf16.mxu0 0
    %198 = vmatpush1.bf16.xpose.msra.mxu0 0
    %199 = vmatprep.subr.bf16.mxu0 0
    %200 = vmatpush1.bf16.xpose.msra.mxu0 0
    %201 = vmatprep.subr.bf16.mxu0 0
    %202 = vmatpush1.bf16.xpose.msra.mxu0 0
    %203 = vmatprep.mubr.bf16.mxu0 0
    %204 = vmatmul.mubr.bf16.gmra.mrb[0].mxu0 %v136
    %v205 = vpop.f32.mrb[0].mxu0
    %v206 = vadd.f32 %v77, %v205
    %v207 = vpop.f32.mrb[0].mxu0
    %v208 = vpop.f32.mrb[0].mxu0
    %v209 = vadd.f32 %v82, %v208
    %v210 = vpop.f32.mrb[0].mxu0
    %211 = vmatprep.mubr.bf16.mxu0 0
    %212 = vmatmul.mubr.bf16.gmra.mrb[0].mxu0 %v139
    %v213 = vpop.f32.mrb[0].mxu0
    %v214 = vadd.f32 %v87, %v213
    %v215 = vpop.f32.mrb[0].mxu0
    %v216 = vpop.f32.mrb[0].mxu0
    %v217 = vadd.f32 %v92, %v216
    %v218 = vpop.f32.mrb[0].mxu0
    %219 = vmatprep.mubr.bf16.mxu0 0
    %220 = vmatmul.mubr.bf16.gmra.mrb[0].mxu0 %v142
    %v221 = vpop.f32.mrb[0].mxu0
    %v222 = vadd.f32 %v97, %v221
    %v223 = vpop.f32.mrb[0].mxu0
    %v224 = vpop.f32.mrb[0].mxu0
    %v225 = vadd.f32 %v102, %v224
    %v226 = vpop.f32.mrb[0].mxu0
    %227 = vmatprep.mubr.bf16.mxu0 0
    %228 = vmatmul.mubr.bf16.gmra.mrb[0].mxu0 %v145
    %v229 = vpop.f32.mrb[0].mxu0
    %v230 = vadd.f32 %v107, %v229
    %v231 = vpop.f32.mrb[0].mxu0
    %v232 = vpop.f32.mrb[0].mxu0
    %v233 = vadd.f32 %v112, %v232
    %v234 = vpop.f32.mrb[0].mxu0
    %235 = vdwg.mxu0
    %v236 = vmax.f32 %v206, 0.0
    %v237 = vmax.f32 %v209, 0.0
    %v238 = vmax.f32 %v214, 0.0
    %v239 = vmax.f32 %v217, 0.0
    %v240 = vmax.f32 %v222, 0.0
    %v241 = vmax.f32 %v225, 0.0
    %v242 = vmax.f32 %v230, 0.0
    %v243 = vmax.f32 %v233, 0.0
    %v244 = vpack.c.bf16 %v237, %v236
    %v245 = vpack.c.bf16 %v239, %v238
    %v246 = vpack.c.bf16 %v241, %v240
    %v247 = vpack.c.bf16 %v243, %v242
    %v248 = vld [vmem:[%s3] sm:$0xf]
    %v249 = vld [vmem:[%s3 + $0x4] sm:$0xf]
    %v250 = vld [vmem:[%s3 + $0x8] sm:$0xf]
    %v251 = vld [vmem:[%s3 + $0xc] sm:$0xf]
    %v252 = vld [vmem:[%s3 + $0x10] sm:$0xf]
    %v253 = vld [vmem:[%s3 + $0x14] sm:$0xf]
    %v254 = vld [vmem:[%s3 + $0x18] sm:$0xf]
    %v255 = vld [vmem:[%s3 + $0x1c] sm:$0xf]
    %v256 = vld [vmem:[%s3 + $0x20] sm:$0xf]
    %v257 = vld [vmem:[%s3 + $0x24] sm:$0xf]
    %v258 = vld [vmem:[%s3 + $0x28] sm:$0xf]
    %v259 = vld [vmem:[%s3 + $0x2c] sm:$0xf]
    %v260 = vld [vmem:[%s3 + $0x30] sm:$0xf]
    %v261 = vld [vmem:[%s3 + $0x34] sm:$0xf]
    %v262 = vld [vmem:[%s3 + $0x38] sm:$0xf]
    %v263 = vld [vmem:[%s3 + $0x3c] sm:$0xf]
    %v264 = vld [vmem:[%s4] sm:$0xff]
    %v265 = vld [vmem:[%s4 + $0x8] sm:$0xff]
    %v266 = vld [vmem:[%s4 + $0x10] sm:$0xff]
    %v267 = vld [vmem:[%s4 + $0x18] sm:$0xff]
    %v268 = vld [vmem:[%s4 + $0x20] sm:$0xff]
    %v269 = vld [vmem:[%s4 + $0x28] sm:$0xff]
    %v270 = vld [vmem:[%s4 + $0x30] sm:$0xff]
    %v271 = vld [vmem:[%s4 + $0x38] sm:$0xff]
    %v272 = vld [vmem:[%s4 + $0x40] sm:$0xff]
    %v273 = vld [vmem:[%s4 + $0x48] sm:$0xff]
    %v274 = vld [vmem:[%s4 + $0x50] sm:$0xff]
    %v275 = vld [vmem:[%s4 + $0x58] sm:$0xff]
    %v276 = vld [vmem:[%s4 + $0x60] sm:$0xff]
    %v277 = vld [vmem:[%s4 + $0x68] sm:$0xff]
    %v278 = vld [vmem:[%s4 + $0x70] sm:$0xff]
    %v279 = vld [vmem:[%s4 + $0x78] sm:$0xff]
    %281 = vset.pattern.permute.xlu0 0
    %282 = vperm.xlu0 %281, %v264
    %v283 = vpop.permute.xlu0 %282
    %286 = vset.pattern.permute.xlu0 0
    %287 = vperm.xlu0 %286, %v265
    %v288 = vpop.permute.xlu0 %287
    %291 = vset.pattern.permute.xlu0 0
    %292 = vperm.xlu0 %291, %v266
    %v293 = vpop.permute.xlu0 %292
    %296 = vset.pattern.permute.xlu0 0
    %297 = vperm.xlu0 %296, %v267
    %v298 = vpop.permute.xlu0 %297
    %301 = vset.pattern.permute.xlu0 0
    %302 = vperm.xlu0 %301, %v268
    %v303 = vpop.permute.xlu0 %302
    %306 = vset.pattern.permute.xlu0 0
    %307 = vperm.xlu0 %306, %v269
    %v308 = vpop.permute.xlu0 %307
    %311 = vset.pattern.permute.xlu0 0
    %312 = vperm.xlu0 %311, %v270
    %v313 = vpop.permute.xlu0 %312
    %316 = vset.pattern.permute.xlu0 0
    %317 = vperm.xlu0 %316, %v271
    %v318 = vpop.permute.xlu0 %317
    %321 = vset.pattern.permute.xlu0 0
    %322 = vperm.xlu0 %321, %v272
    %v323 = vpop.permute.xlu0 %322
    %326 = vset.pattern.permute.xlu0 0
    %327 = vperm.xlu0 %326, %v273
    %v328 = vpop.permute.xlu0 %327
    %331 = vset.pattern.permute.xlu0 0
    %332 = vperm.xlu0 %331, %v274
    %v333 = vpop.permute.xlu0 %332
    %336 = vset.pattern.permute.xlu0 0
    %337 = vperm.xlu0 %336, %v275
    %v338 = vpop.permute.xlu0 %337
    %341 = vset.pattern.permute.xlu0 0
    %342 = vperm.xlu0 %341, %v276
    %v343 = vpop.permute.xlu0 %342
    %346 = vset.pattern.permute.xlu0 0
    %347 = vperm.xlu0 %346, %v277
    %v348 = vpop.permute.xlu0 %347
    %351 = vset.pattern.permute.xlu0 0
    %352 = vperm.xlu0 %351, %v278
    %v353 = vpop.permute.xlu0 %352
    %356 = vset.pattern.permute.xlu0 0
    %357 = vperm.xlu0 %356, %v279
    %v358 = vpop.permute.xlu0 %357
    %v376 = vunpack.c.l.b16 %v248
    %v377 = vunpack.c.l.b16 %v249
    %v378 = vunpack.c.l.b16 %v250
    %v379 = vunpack.c.l.b16 %v251
    %v380 = vunpack.c.l.b16 %v252
    %v381 = vunpack.c.l.b16 %v253
    %v382 = vunpack.c.l.b16 %v254
    %v383 = vunpack.c.l.b16 %v255
    %v384 = vunpack.c.l.b16 %v256
    %v385 = vunpack.c.l.b16 %v257
    %v386 = vunpack.c.l.b16 %v258
    %v387 = vunpack.c.l.b16 %v259
    %v388 = vunpack.c.l.b16 %v260
    %v389 = vunpack.c.l.b16 %v261
    %v390 = vunpack.c.l.b16 %v262
    %v391 = vunpack.c.l.b16 %v263
    %v392 = vpack.c.b16 %v377, %v376
    %v393 = vpack.c.b16 %v379, %v378
    %v394 = vpack.c.b16 %v381, %v380
    %v395 = vpack.c.b16 %v383, %v382
    %v396 = vpack.c.b16 %v385, %v384
    %v397 = vpack.c.b16 %v387, %v386
    %v398 = vpack.c.b16 %v389, %v388
    %v399 = vpack.c.b16 %v391, %v390
    %vm400 = vcmask 523264
    %v402 = vsel %vm400, %v392, 0
    %v405 = vsel %vm400, %v393, 0
    %v408 = vsel %vm400, %v394, 0
    %v411 = vsel %vm400, %v395, 0
    %v414 = vsel %vm400, %v396, 0
    %v417 = vsel %vm400, %v397, 0
    %v420 = vsel %vm400, %v398, 0
    %v423 = vsel %vm400, %v399, 0
    %425 = vmatprep.subr.bf16.mxu0 0
    %426 = vmatpush1.bf16.msra.mxu0 %v244
    %427 = vmatprep.subr.bf16.mxu0 0
    %428 = vmatpush1.bf16.msra.mxu0 %v245
    %429 = vmatprep.subr.bf16.mxu0 0
    %430 = vmatpush1.bf16.msra.mxu0 %v246
    %431 = vmatprep.subr.bf16.mxu0 0
    %432 = vmatpush1.bf16.msra.mxu0 %v247
    %433 = vmatprep.subr.bf16.mxu0 0
    %434 = vmatpush1.bf16.msra.mxu0 0
    %435 = vmatprep.subr.bf16.mxu0 0
    %436 = vmatpush1.bf16.msra.mxu0 0
    %437 = vmatprep.subr.bf16.mxu0 0
    %438 = vmatpush1.bf16.msra.mxu0 0
    %439 = vmatprep.subr.bf16.mxu0 0
    %440 = vmatpush1.bf16.msra.mxu0 0
    %441 = vmatprep.subr.bf16.mxu0 0
    %442 = vmatpush1.bf16.msra.mxu0 0
    %443 = vmatprep.subr.bf16.mxu0 0
    %444 = vmatpush1.bf16.msra.mxu0 0
    %445 = vmatprep.subr.bf16.mxu0 0
    %446 = vmatpush1.bf16.msra.mxu0 0
    %447 = vmatprep.subr.bf16.mxu0 0
    %448 = vmatpush1.bf16.msra.mxu0 0
    %449 = vmatprep.subr.bf16.mxu0 0
    %450 = vmatpush1.bf16.msra.mxu0 0
    %451 = vmatprep.subr.bf16.mxu0 0
    %452 = vmatpush1.bf16.msra.mxu0 0
    %453 = vmatprep.subr.bf16.mxu0 0
    %454 = vmatpush1.bf16.msra.mxu0 0
    %455 = vmatprep.subr.bf16.mxu0 0
    %456 = vmatpush1.bf16.msra.mxu0 0
    %457 = vmatprep.mubr.bf16.mxu0 0
    %458 = vmatmul.mubr.bf16.gmra.mrb[0].mxu0 %v402
    %v459 = vpop.f32.mrb[0].mxu0
    %v460 = vadd.f32 %v283, %v459
    %v461 = vpop.f32.mrb[0].mxu0
    %v462 = vpop.f32.mrb[0].mxu0
    %v463 = vadd.f32 %v288, %v462
    %v464 = vpop.f32.mrb[0].mxu0
    %465 = vmatprep.mubr.bf16.mxu0 0
    %466 = vmatmul.mubr.bf16.gmra.mrb[0].mxu0 %v405
    %v467 = vpop.f32.mrb[0].mxu0
    %v468 = vadd.f32 %v293, %v467
    %v469 = vpop.f32.mrb[0].mxu0
    %v470 = vpop.f32.mrb[0].mxu0
    %v471 = vadd.f32 %v298, %v470
    %v472 = vpop.f32.mrb[0].mxu0
    %473 = vmatprep.mubr.bf16.mxu0 0
    %474 = vmatmul.mubr.bf16.gmra.mrb[0].mxu0 %v408
    %v475 = vpop.f32.mrb[0].mxu0
    %v476 = vadd.f32 %v303, %v475
    %v477 = vpop.f32.mrb[0].mxu0
    %v478 = vpop.f32.mrb[0].mxu0
    %v479 = vadd.f32 %v308, %v478
    %v480 = vpop.f32.mrb[0].mxu0
    %481 = vmatprep.mubr.bf16.mxu0 0
    %482 = vmatmul.mubr.bf16.gmra.mrb[0].mxu0 %v411
    %v483 = vpop.f32.mrb[0].mxu0
    %v484 = vadd.f32 %v313, %v483
    %v485 = vpop.f32.mrb[0].mxu0
    %v486 = vpop.f32.mrb[0].mxu0
    %v487 = vadd.f32 %v318, %v486
    %v488 = vpop.f32.mrb[0].mxu0
    %489 = vmatprep.mubr.bf16.mxu0 0
    %490 = vmatmul.mubr.bf16.gmra.mrb[0].mxu0 %v414
    %v491 = vpop.f32.mrb[0].mxu0
    %v492 = vadd.f32 %v323, %v491
    %v493 = vpop.f32.mrb[0].mxu0
    %v494 = vpop.f32.mrb[0].mxu0
    %v495 = vadd.f32 %v328, %v494
    %v496 = vpop.f32.mrb[0].mxu0
    %497 = vmatprep.mubr.bf16.mxu0 0
    %498 = vmatmul.mubr.bf16.gmra.mrb[0].mxu0 %v417
    %v499 = vpop.f32.mrb[0].mxu0
    %v500 = vadd.f32 %v333, %v499
    %v501 = vpop.f32.mrb[0].mxu0
    %v502 = vpop.f32.mrb[0].mxu0
    %v503 = vadd.f32 %v338, %v502
    %v504 = vpop.f32.mrb[0].mxu0
    %505 = vmatprep.mubr.bf16.mxu0 0
    %506 = vmatmul.mubr.bf16.gmra.mrb[0].mxu0 %v420
    %v507 = vpop.f32.mrb[0].mxu0
    %v508 = vadd.f32 %v343, %v507
    %v509 = vpop.f32.mrb[0].mxu0
    %v510 = vpop.f32.mrb[0].mxu0
    %v511 = vadd.f32 %v348, %v510
    %v512 = vpop.f32.mrb[0].mxu0
    %513 = vmatprep.mubr.bf16.mxu0 0
    %514 = vmatmul.mubr.bf16.gmra.mrb[0].mxu0 %v423
    %v515 = vpop.f32.mrb[0].mxu0
    %v516 = vadd.f32 %v353, %v515
    %v517 = vpop.f32.mrb[0].mxu0
    %v518 = vpop.f32.mrb[0].mxu0
    %v519 = vadd.f32 %v358, %v518
    %v520 = vpop.f32.mrb[0].mxu0
    %521 = vdwg.mxu0
    %v522 = vmax.f32 %v460, 0.0
    %v523 = vmax.f32 %v463, 0.0
    %v524 = vmax.f32 %v468, 0.0
    %v525 = vmax.f32 %v471, 0.0
    %v526 = vmax.f32 %v476, 0.0
    %v527 = vmax.f32 %v479, 0.0
    %v528 = vmax.f32 %v484, 0.0
    %v529 = vmax.f32 %v487, 0.0
    %v530 = vmax.f32 %v492, 0.0
    %v531 = vmax.f32 %v495, 0.0
    %v532 = vmax.f32 %v500, 0.0
    %v533 = vmax.f32 %v503, 0.0
    %v534 = vmax.f32 %v508, 0.0
    %v535 = vmax.f32 %v511, 0.0
    %v536 = vmax.f32 %v516, 0.0
    %v537 = vmax.f32 %v519, 0.0
    %v538 = vpack.c.bf16 %v523, %v522
    %v539 = vpack.c.bf16 %v525, %v524
    %v540 = vpack.c.bf16 %v527, %v526
    %v541 = vpack.c.bf16 %v529, %v528
    %v542 = vpack.c.bf16 %v531, %v530
    %v543 = vpack.c.bf16 %v533, %v532
    %v544 = vpack.c.bf16 %v535, %v534
    %v545 = vpack.c.bf16 %v537, %v536
    %v546 = vld [vmem:[%s5] sm:$0xf]
    %v547 = vld [vmem:[%s5 + $0x4] sm:$0xf]
    %v548 = vld [vmem:[%s5 + $0x8] sm:$0xf]
    %v549 = vld [vmem:[%s5 + $0xc] sm:$0xf]
    %v550 = vld [vmem:[%s5 + $0x10] sm:$0xf]
    %v551 = vld [vmem:[%s5 + $0x14] sm:$0xf]
    %v552 = vld [vmem:[%s5 + $0x18] sm:$0xf]
    %v553 = vld [vmem:[%s5 + $0x1c] sm:$0xf]
    %v554 = vld [vmem:[%s6] sm:$0xff]
    %v555 = vld [vmem:[%s6 + $0x8] sm:$0xff]
    %v556 = vld [vmem:[%s6 + $0x10] sm:$0xff]
    %v557 = vld [vmem:[%s6 + $0x18] sm:$0xff]
    %v558 = vld [vmem:[%s6 + $0x20] sm:$0xff]
    %v559 = vld [vmem:[%s6 + $0x28] sm:$0xff]
    %v560 = vld [vmem:[%s6 + $0x30] sm:$0xff]
    %v561 = vld [vmem:[%s6 + $0x38] sm:$0xff]
    %563 = vset.pattern.permute.xlu0 0
    %564 = vperm.xlu0 %563, %v554
    %v565 = vpop.permute.xlu0 %564
    %568 = vset.pattern.permute.xlu0 0
    %569 = vperm.xlu0 %568, %v555
    %v570 = vpop.permute.xlu0 %569
    %573 = vset.pattern.permute.xlu0 0
    %574 = vperm.xlu0 %573, %v556
    %v575 = vpop.permute.xlu0 %574
    %578 = vset.pattern.permute.xlu0 0
    %579 = vperm.xlu0 %578, %v557
    %v580 = vpop.permute.xlu0 %579
    %583 = vset.pattern.permute.xlu0 0
    %584 = vperm.xlu0 %583, %v558
    %v585 = vpop.permute.xlu0 %584
    %588 = vset.pattern.permute.xlu0 0
    %589 = vperm.xlu0 %588, %v559
    %v590 = vpop.permute.xlu0 %589
    %593 = vset.pattern.permute.xlu0 0
    %594 = vperm.xlu0 %593, %v560
    %v595 = vpop.permute.xlu0 %594
    %598 = vset.pattern.permute.xlu0 0
    %599 = vperm.xlu0 %598, %v561
    %v600 = vpop.permute.xlu0 %599
    %v610 = vunpack.c.l.b16 %v546
    %v611 = vunpack.c.l.b16 %v547
    %v612 = vunpack.c.l.b16 %v548
    %v613 = vunpack.c.l.b16 %v549
    %v614 = vunpack.c.l.b16 %v550
    %v615 = vunpack.c.l.b16 %v551
    %v616 = vunpack.c.l.b16 %v552
    %v617 = vunpack.c.l.b16 %v553
    %v618 = vpack.c.b16 %v611, %v610
    %v619 = vpack.c.b16 %v613, %v612
    %v620 = vpack.c.b16 %v615, %v614
    %v621 = vpack.c.b16 %v617, %v616
    %626 = vmatprep.subr.bf16.mxu0 0
    %627 = vmatpush1.bf16.msra.mxu0 %v538
    %628 = vmatprep.subr.bf16.mxu0 0
    %629 = vmatpush1.bf16.msra.mxu0 %v539
    %630 = vmatprep.subr.bf16.mxu0 0
    %631 = vmatpush1.bf16.msra.mxu0 %v540
    %632 = vmatprep.subr.bf16.mxu0 0
    %633 = vmatpush1.bf16.msra.mxu0 %v541
    %634 = vmatprep.subr.bf16.mxu0 0
    %635 = vmatpush1.bf16.msra.mxu0 %v542
    %636 = vmatprep.subr.bf16.mxu0 0
    %637 = vmatpush1.bf16.msra.mxu0 %v543
    %638 = vmatprep.subr.bf16.mxu0 0
    %639 = vmatpush1.bf16.msra.mxu0 %v544
    %640 = vmatprep.subr.bf16.mxu0 0
    %641 = vmatpush1.bf16.msra.mxu0 %v545
    %642 = vmatprep.subr.bf16.mxu0 0
    %643 = vmatpush1.bf16.msra.mxu0 0
    %644 = vmatprep.subr.bf16.mxu0 0
    %645 = vmatpush1.bf16.msra.mxu0 0
    %646 = vmatprep.subr.bf16.mxu0 0
    %647 = vmatpush1.bf16.msra.mxu0 0
    %648 = vmatprep.subr.bf16.mxu0 0
    %649 = vmatpush1.bf16.msra.mxu0 0
    %650 = vmatprep.subr.bf16.mxu0 0
    %651 = vmatpush1.bf16.msra.mxu0 0
    %652 = vmatprep.subr.bf16.mxu0 0
    %653 = vmatpush1.bf16.msra.mxu0 0
    %654 = vmatprep.subr.bf16.mxu0 0
    %655 = vmatpush1.bf16.msra.mxu0 0
    %656 = vmatprep.subr.bf16.mxu0 0
    %657 = vmatpush1.bf16.msra.mxu0 0
    %658 = vmatprep.mubr.bf16.mxu0 0
    %659 = vmatmul.mubr.bf16.gmra.mrb[0].mxu0 %v618
    %v660 = vpop.f32.mrb[0].mxu0
    %v661 = vadd.f32 %v565, %v660
    %v662 = vpop.f32.mrb[0].mxu0
    %v663 = vpop.f32.mrb[0].mxu0
    %v664 = vadd.f32 %v570, %v663
    %v665 = vpop.f32.mrb[0].mxu0
    %666 = vmatprep.mubr.bf16.mxu0 0
    %667 = vmatmul.mubr.bf16.gmra.mrb[0].mxu0 %v619
    %v668 = vpop.f32.mrb[0].mxu0
    %v669 = vadd.f32 %v575, %v668
    %v670 = vpop.f32.mrb[0].mxu0
    %v671 = vpop.f32.mrb[0].mxu0
    %v672 = vadd.f32 %v580, %v671
    %v673 = vpop.f32.mrb[0].mxu0
    %674 = vmatprep.mubr.bf16.mxu0 0
    %675 = vmatmul.mubr.bf16.gmra.mrb[0].mxu0 %v620
    %v676 = vpop.f32.mrb[0].mxu0
    %v677 = vadd.f32 %v585, %v676
    %v678 = vpop.f32.mrb[0].mxu0
    %v679 = vpop.f32.mrb[0].mxu0
    %v680 = vadd.f32 %v590, %v679
    %v681 = vpop.f32.mrb[0].mxu0
    %682 = vmatprep.mubr.bf16.mxu0 0
    %683 = vmatmul.mubr.bf16.gmra.mrb[0].mxu0 %v621
    %v684 = vpop.f32.mrb[0].mxu0
    %v685 = vadd.f32 %v595, %v684
    %v686 = vpop.f32.mrb[0].mxu0
    %v687 = vpop.f32.mrb[0].mxu0
    %v688 = vadd.f32 %v600, %v687
    %v689 = vpop.f32.mrb[0].mxu0
    %690 = vdwg.mxu0
    %v691 = vmax.f32 %v661, 0.0
    %v692 = vmax.f32 %v664, 0.0
    %v693 = vmax.f32 %v669, 0.0
    %v694 = vmax.f32 %v672, 0.0
    %v695 = vmax.f32 %v677, 0.0
    %v696 = vmax.f32 %v680, 0.0
    %v697 = vmax.f32 %v685, 0.0
    %v698 = vmax.f32 %v688, 0.0
    %v699 = vpack.c.bf16 %v692, %v691
    %v700 = vpack.c.bf16 %v694, %v693
    %v701 = vpack.c.bf16 %v696, %v695
    %v702 = vpack.c.bf16 %v698, %v697
    %v703 = vld [vmem:[%s7] sm:$0x3]
    %v704 = vld [vmem:[%s8] sm:$0xf]
    %706 = vset.pattern.permute.xlu0 0
    %707 = vperm.xlu0 %706, %v704
    %v708 = vpop.permute.xlu0 %707
    %v711 = vsel %vm400, %v703, 0
    %713 = vmatprep.subr.bf16.mxu0 0
    %714 = vmatpush1.bf16.msra.mxu0 %v699
    %715 = vmatprep.subr.bf16.mxu0 0
    %716 = vmatpush1.bf16.msra.mxu0 %v700
    %717 = vmatprep.subr.bf16.mxu0 0
    %718 = vmatpush1.bf16.msra.mxu0 %v701
    %719 = vmatprep.subr.bf16.mxu0 0
    %720 = vmatpush1.bf16.msra.mxu0 %v702
    %721 = vmatprep.subr.bf16.mxu0 0
    %722 = vmatpush1.bf16.msra.mxu0 0
    %723 = vmatprep.subr.bf16.mxu0 0
    %724 = vmatpush1.bf16.msra.mxu0 0
    %725 = vmatprep.subr.bf16.mxu0 0
    %726 = vmatpush1.bf16.msra.mxu0 0
    %727 = vmatprep.subr.bf16.mxu0 0
    %728 = vmatpush1.bf16.msra.mxu0 0
    %729 = vmatprep.subr.bf16.mxu0 0
    %730 = vmatpush1.bf16.msra.mxu0 0
    %731 = vmatprep.subr.bf16.mxu0 0
    %732 = vmatpush1.bf16.msra.mxu0 0
    %733 = vmatprep.subr.bf16.mxu0 0
    %734 = vmatpush1.bf16.msra.mxu0 0
    %735 = vmatprep.subr.bf16.mxu0 0
    %736 = vmatpush1.bf16.msra.mxu0 0
    %737 = vmatprep.subr.bf16.mxu0 0
    %738 = vmatpush1.bf16.msra.mxu0 0
    %739 = vmatprep.subr.bf16.mxu0 0
    %740 = vmatpush1.bf16.msra.mxu0 0
    %741 = vmatprep.subr.bf16.mxu0 0
    %742 = vmatpush1.bf16.msra.mxu0 0
    %743 = vmatprep.subr.bf16.mxu0 0
    %744 = vmatpush1.bf16.msra.mxu0 0
    %745 = vmatprep.mubr.bf16.mxu0 0
    %746 = vmatmul.mubr.bf16.gmra.mrb[0].mxu0 %v711
    %v747 = vpop.f32.mrb[0].mxu0
    %v748 = vadd.f32 %v708, %v747
    %v749 = vpop.f32.mrb[0].mxu0
    %v750 = vpop.f32.mrb[0].mxu0
    %v751 = vpop.f32.mrb[0].mxu0
    %752 = vdwg.mxu0
    %753 = vst [vmem:[#allocation2] sm:$0xf] %v748
    // Predicated region
    $region38: #{tpu_custom_call.1} parent=1 // pred_check
      _
    $region39: #{tpu_custom_call.1} parent=1 // pred_check_branch
      %755 = sbr.rel (0) target = $region41
    $region40: #{tpu_custom_call.1} parent=1 // pred_region
      %s757 = ssub.s32 64, 64
      %758 = vsyncadd [#allocation3], %s757
      %s760 = sshll.u32 [#allocation2], 4
      %s761 = int_to_ptr.vmem [resolvable:$true] %s760
      %763 = dma.vmem_to_hbm [thread:$0]  %s761, 64, %s9, [#allocation3]
    $region41: #{tpu_custom_call.1} parent=1 // pred_fallthru
      _
    // Predicated region
    $region42: #{tpu_custom_call.1} parent=1 // pred_check
      _
    $region43: #{tpu_custom_call.1} parent=1 // pred_check_branch
      %765 = sbr.rel (0) target = $region45
    $region44: #{tpu_custom_call.1} parent=1 // pred_region
      %766 = dma.done [#allocation3], 64
    $region45: #{tpu_custom_call.1} parent=1 // pred_fallthru
      _
    %767 = vsyncpa [#allocation3], 1

</llo_original>
